<compile_context>
chip_gen: v7x
topology: tpu7x:2x2x1
jax: 0.10.0
libtpu: 0.0.40
codegen_flags: <defaults>
</compile_context>

<pallas_src>
import jax
import jax.numpy as jnp
from jax.experimental import pallas as pl
from jax.experimental.pallas import tpu as pltpu

_LANE = 128


def _make_range_kernel(from_range, to_range):
    fmin, fmax = from_range
    tmin, tmax = to_range
    fmin_f = float(fmin)
    denom = float(fmax - fmin)          # like torch's float(fmax - fmin); 0.0 -> inf/nan per element
    tdelta = float(tmax) - float(tmin)
    tmin_f = float(tmin)

    def kernel(x_ref, o_ref):
        # f32 compute is free filler on a DMA-bound kernel; cast on the store.
        x = x_ref[...].astype(jnp.float32)
        y = (x - fmin_f) / denom * tdelta + tmin_f
        o_ref[...] = y.astype(o_ref.dtype)

    return kernel


def _vmem_budget():
    """(max_block_bytes, vmem_limit_bytes), chosen per TPU generation."""
    block_bytes = 4 << 20     # v5e/v6e default: 4 MiB blocks (128 MiB physical VMEM)
    vmem_limit = 32 << 20     # raises v5e's 16 MiB default scoped limit; v6e default already 32
    try:
        info = pltpu.get_tpu_info()
        vmem_phys = getattr(info, "vmem_capacity_bytes", None)
        if vmem_phys is not None and vmem_phys <= (96 << 20):
            # v7x-class chip: 64 MiB VMEM but ~3.2 TB/s HBM -> bigger blocks so
            # the ~0.35us per-grid-step overhead stays <10% of each step's DMA.
            block_bytes = 8 << 20
            vmem_limit = 40 << 20   # 2 bufs x (in+out) x 8 MiB = 32 MiB + headroom, < 64 MiB physical
    except Exception:
        pass
    return block_bytes, vmem_limit


def _pick_tile_rows(rows, itemsize, max_block_bytes):
    """Rows per (rows, 128) block (also used as tr for 1-D blocks of tr*128).

    * Sized by BYTES (2-8 MiB sweet spot) so bf16/int8 get the same block
      bytes as f32, not 2-4x smaller.
    * >=2 grid steps once the slab is non-tiny (v7x megacore + load/store
      overlap), >=4 steps for large slabs (balanced megacore sharding).
    * Row count is a multiple of the dtype's sublane packing (8/16/32) so
      every non-final block obeys the (8,128) tiling rule.
    """
    row_bytes = _LANE * itemsize
    mult = max(8, 32 // itemsize)                      # 8 f32, 16 bf16, 32 int8
    max_rows = max(mult, (max_block_bytes // row_bytes) // mult * mult)

    if rows < 256:
        return rows                                    # single full-extent block
    if rows <= max_rows:
        return -(-((rows + 1) // 2) // mult) * mult    # ~rows/2 -> exactly 2 grid steps
    tr = max_rows
    min_rows = max(mult, ((1 << 20) // row_bytes) // mult * mult)   # ~1 MiB floor
    while rows < 4 * tr and tr // 2 >= min_rows:
        tr //= 2
    return max(mult, (tr // mult) * mult)


def _stream(kernel, arr, block_shape, index_map, grid, cparams, cost):
    return pl.pallas_call(
        kernel,
        out_shape=jax.ShapeDtypeStruct(arr.shape, arr.dtype),
        grid_spec=pltpu.PrefetchScalarGridSpec(
            num_scalar_prefetch=0,
            grid=grid,
            in_specs=[pl.BlockSpec(block_shape, index_map)],
            out_specs=pl.BlockSpec(block_shape, index_map),
        ),
        compiler_params=cparams,
        cost_estimate=cost,
    )(arr)


def linear_range_transform(x, from_range, to_range):
    """Elementwise y = (x - fmin) / (fmax - fmin) * (tmax - tmin) + tmin."""
    orig_shape = x.shape
    total = int(x.size)
    if total == 0:
        return x

    itemsize = jnp.dtype(x.dtype).itemsize
    kernel = _make_range_kernel(from_range, to_range)
    max_block_bytes, vmem_limit = _vmem_budget()
    cparams = pltpu.CompilerParams(
        dimension_semantics=("parallel",),
        vmem_limit_bytes=vmem_limit,
    )
    cost = pl.CostEstimate(
        flops=4 * total, transcendentals=0, bytes_accessed=2 * total * itemsize
    )

    x_flat = x.reshape(-1)
    rows = -(-total // _LANE)  # ceil(total / 128)

    if total % _LANE == 0:
        # Lane-dense (rows, 128) slab; flatten/reshape is metadata only.
        tr = _pick_tile_rows(rows, itemsize, max_block_bytes)
        y = _stream(kernel, x_flat.reshape(rows, _LANE),
                    (tr, _LANE), lambda i: (i, 0),
                    (pl.cdiv(rows, tr),), cparams, cost)
        return y.reshape(orig_shape)

    if rows >= 1024:
        # Large ragged count: stay 1-D. The masked partial last block handles
        # the tail with zero extra HBM traffic (no pad copy, no slice copy).
        tr = _pick_tile_rows(rows, itemsize, max_block_bytes)   # multiple of 8*packing
        blk = tr * _LANE
        y = _stream(kernel, x_flat, (blk,), lambda i: (i,),
                    (pl.cdiv(total, blk),), cparams, cost)
        return y.reshape(orig_shape)

    # Tiny ragged count: pad/slice copies are negligible at this size.
    pad = rows * _LANE - total
    xp = jnp.pad(x_flat, (0, pad)).reshape(rows, _LANE)
    tr = _pick_tile_rows(rows, itemsize, max_block_bytes)
    y = _stream(kernel, xp, (tr, _LANE), lambda i: (i, 0),
                (pl.cdiv(rows, tr),), cparams, cost)
    return y.reshape(-1)[:total].reshape(orig_shape)


if __name__ == "__main__":
    key = jax.random.PRNGKey(0)
    from_range = (0.0, 1.0)
    to_range = (-2.0, 5.0)
    fmin, fmax = from_range
    tmin, tmax = to_range

    def ref(x):
        xf = x.astype(jnp.float32)
        y = (xf - fmin) / float(fmax - fmin) * (tmax - tmin) + tmin
        return y.astype(x.dtype)

    # Primary: small NCHW image tensor (aligned 2-D path, single block).
    x = jax.random.uniform(key, (2, 4, 16, 16), dtype=jnp.float32)
    y = jax.block_until_ready(linear_range_transform(x, from_range, to_range))
    assert y.shape == x.shape and y.dtype == x.dtype
    assert jnp.allclose(y, ref(x), atol=1e-5, rtol=1e-5)

    # Ragged element counts: tiny (pad fallback) and modest (copy-free 1-D path
    # with a masked partial last block and a 2-step parallel grid).
    for shape in [(2, 3, 7, 5), (3, 5, 99, 89)]:
        key, sub = jax.random.split(key)
        xr = jax.random.uniform(sub, shape, dtype=jnp.float32)
        yr = jax.block_until_ready(linear_range_transform(xr, from_range, to_range))
        assert yr.shape == xr.shape and yr.dtype == xr.dtype
        assert jnp.allclose(yr, ref(xr), atol=1e-5, rtol=1e-5)

    # bf16 input: computed in f32 inside the kernel, stored as bf16.
    key, sub = jax.random.split(key)
    xb = jax.random.uniform(sub, (2, 4, 16, 16), dtype=jnp.bfloat16)
    yb = jax.block_until_ready(linear_range_transform(xb, from_range, to_range))
    assert yb.shape == xb.shape and yb.dtype == jnp.bfloat16
    assert jnp.allclose(yb.astype(jnp.float32), ref(xb).astype(jnp.float32),
                        atol=5e-2, rtol=5e-2)

    print("KERNEL_OK")
</pallas_src>

<mosaic_0001>
module attributes {stable_mosaic.version = 11 : i64} {
  func.func @kernel(%arg0: i32, %arg1: memref<16x128xf32, #tpu.memory_space<vmem>>, %arg2: memref<16x128xf32, #tpu.memory_space<vmem>>) attributes {dimension_semantics = [#tpu.dimension_semantics<parallel>], iteration_bounds = array<i64: 1>, scalar_prefetch = 0 : i64, scratch_operands = 0 : i64, tpu.core_type = #tpu.core_type<tc>, window_params = [{transform_indices = @transform_0, window_bounds = array<i64: 16, 128>}, {transform_indices = @transform_1, window_bounds = array<i64: 16, 128>}]} {
    %c0 = arith.constant 0 : index
    %c0_0 = arith.constant 0 : index
    %0 = vector.load %arg1[%c0, %c0_0] : memref<16x128xf32, #tpu.memory_space<vmem>>, vector<16x128xf32>
    %cst = arith.constant 0.000000e+00 : f32
    %1 = vector.broadcast %cst : f32 to vector<16x128xf32>
    %2 = arith.subf %0, %1 : vector<16x128xf32>
    %cst_1 = arith.constant 1.000000e+00 : f32
    %3 = vector.broadcast %cst_1 : f32 to vector<16x128xf32>
    %4 = arith.divf %2, %3 : vector<16x128xf32>
    %cst_2 = arith.constant 7.000000e+00 : f32
    %5 = vector.broadcast %cst_2 : f32 to vector<16x128xf32>
    %6 = arith.mulf %4, %5 : vector<16x128xf32>
    %cst_3 = arith.constant -2.000000e+00 : f32
    %7 = vector.broadcast %cst_3 : f32 to vector<16x128xf32>
    %8 = arith.addf %6, %7 : vector<16x128xf32>
    %c0_4 = arith.constant 0 : index
    %c0_5 = arith.constant 0 : index
    %9 = vector.load %arg2[%c0_4, %c0_5] : memref<16x128xf32, #tpu.memory_space<vmem>>, vector<16x128xf32>
    tpu.vector_store %arg2[%c0_4, %c0_5], %8 {strides = array<i32>} : memref<16x128xf32, #tpu.memory_space<vmem>>, vector<16x128xf32>,
    return
  }
  func.func @transform_0(%arg0: i32) -> (i32, i32) {
    %c0_i32 = arith.constant 0 : i32
    %c0_i32_0 = arith.constant 0 : i32
    return %arg0, %c0_i32 : i32, i32
  }
  func.func @transform_1(%arg0: i32) -> (i32, i32) {
    %c0_i32 = arith.constant 0 : i32
    %c0_i32_0 = arith.constant 0 : i32
    return %arg0, %c0_i32 : i32, i32
  }
}

</mosaic_0001>

<llo_original>
// kernel: tpu_custom_call.1
$region0: #{tpu_custom_call.1}
  #allocation0 [shape = 'u32[]', space=smem, size = 0x4, offset = 0x4, fixed_abs, tag = 'smem constant byte address 0x4 - core index']
  #allocation1 [shape = 'u32[144,128]{1,0:T(1,128)}', space=vmem, size = 0x12000, scoped, tag = 'internal scratch']
  %s0 = inlined_call_operand.hbm [shape: f32[16,128], index: 0, kind: input, shape index: {}]
  %s1 = inlined_call_operand.hbm [shape: f32[16,128], index: 1, kind: output, shape index: {}]
  %s2 = sld [smem:[#allocation0]]
  $region18: #{tpu_custom_call.1} parent=0
    _
  %s4 = ssub.s32 1, %s2
  %s5 = scalar_select 0, %s4, %s2
  $region1: #{tpu_custom_call.1} parent=0
    #allocation2 [shape = 'u8[8192]{0}', space=vmem, size = 0x2000, scoped, tag = 'input window, operand 0, single buffered']
    #allocation3 [shape = 's32[1]{0}', space=sflag, size = 0x4, scoped, tag = 'scoped memory for tpu_custom_call.1']
    #allocation4 [shape = 's32[1]{0}', space=sflag, size = 0x4, scoped, tag = 'scoped memory for tpu_custom_call.1']
    #allocation5 [shape = 'u8[8192]{0}', space=vmem, size = 0x2000, scoped, tag = 'output window, operand 0, single buffered']
    %6 = vsyncpa [#allocation3], 0
    %7 = vsyncpa [#allocation4], 0
    // Predicated region
    $region2: #{tpu_custom_call.1} parent=1 // pred_check
      _
    $region3: #{tpu_custom_call.1} parent=1 // pred_check_branch
      %9 = sbr.rel (0) target = $region5
    $region4: #{tpu_custom_call.1} parent=1 // pred_region
      %s11 = ssub.s32 256, 256
      %12 = vsyncadd [#allocation3], %s11
      %s13 = sshll.u32 [#allocation2], 4
      %s14 = int_to_ptr.vmem [resolvable:$true] %s13
      %19 = dma.hbm_to_vmem [thread:$0]  %s0, 256, %s14, [#allocation3], 128, 128, 8
    $region5: #{tpu_custom_call.1} parent=1 // pred_fallthru
      _
    // Predicated region
    $region6: #{tpu_custom_call.1} parent=1 // pred_check
      _
    $region7: #{tpu_custom_call.1} parent=1 // pred_check_branch
      %21 = sbr.rel (0) target = $region9
    $region8: #{tpu_custom_call.1} parent=1 // pred_region
      %22 = dma.done [#allocation3], 256
    $region9: #{tpu_custom_call.1} parent=1 // pred_fallthru
      _
    %v23 = vld [vmem:[#allocation2] sm:$0xff]
    %v24 = vld [vmem:[#allocation2 + $0x8] sm:$0xff]
    %v25 = vmul.f32 %v23, 7.0
    %v26 = vmul.f32 %v24, 7.0
    %v27 = vadd.f32 %v25, -2.0
    %v28 = vadd.f32 %v26, -2.0
    %29 = vst [vmem:[#allocation5] sm:$0xff] %v27
    %30 = vst [vmem:[#allocation5 + $0x8] sm:$0xff] %v28
    // Predicated region
    $region10: #{tpu_custom_call.1} parent=1 // pred_check
      _
    $region11: #{tpu_custom_call.1} parent=1 // pred_check_branch
      %32 = sbr.rel (0) target = $region13
    $region12: #{tpu_custom_call.1} parent=1 // pred_region
      %s34 = ssub.s32 256, 256
      %35 = vsyncadd [#allocation4], %s34
      %s36 = sshll.u32 [#allocation5], 4
      %s37 = int_to_ptr.vmem [resolvable:$true] %s36
      %42 = dma.vmem_to_hbm [thread:$0]  %s37, 256, %s1, [#allocation4], 128, 128, 8
    $region13: #{tpu_custom_call.1} parent=1 // pred_fallthru
      _
    // Predicated region
    $region14: #{tpu_custom_call.1} parent=1 // pred_check
      _
    $region15: #{tpu_custom_call.1} parent=1 // pred_check_branch
      %44 = sbr.rel (0) target = $region17
    $region16: #{tpu_custom_call.1} parent=1 // pred_region
      %45 = dma.done [#allocation4], 256
    $region17: #{tpu_custom_call.1} parent=1 // pred_fallthru
      _
    %46 = vsyncpa [#allocation3], 1
    %47 = vsyncpa [#allocation4], 1

</llo_original>
